<compile_context>
chip_gen: v7x
topology: tpu7x:2x2x1
jax: 0.10.0
libtpu: 0.0.40
codegen_flags: <defaults>
</compile_context>

<pallas_src>
import math

import jax
import jax.numpy as jnp
from jax.experimental import pallas as pl
from jax.experimental.pallas import tpu as pltpu


_LANES = 128
_W_ROW_ALIGN = 16          # bf16 sublane tile height


def _round_up(x, m):
    return ((x + m - 1) // m) * m


# ----------------------------------------------------------------------------
# Fused kernel: dense decoder stack + temporal decoder + residual add
# ----------------------------------------------------------------------------
def _make_fused_kernel(block_metas, batch, pred_len, p_feat):
    """block_metas: one dict per TideBlock (decoder blocks..., temporal block last)."""

    def kernel(e_ref, cov_ref, res_ref, wbuf_ref, vbuf_ref, o_ref, xt_ref):
        vecs = vbuf_ref[...]                               # [n_vec_rows, 128] f32 (tiny)

        def vec(row, width):                               # one packed bias/γ/β row
            return vecs[row:row + 1, 0:width]

        def tide_block(x_f32, m):
            d_in, d_h, d_out = m["d_in"], m["d_h"], m["d_out"]
            # column-fused [W1 | Wskip] and W2, sliced out of the packed bf16 buffer
            wf = wbuf_ref[m["wf_off"]:m["wf_off"] + d_in, 0:d_h + d_out]
            w2 = wbuf_ref[m["w2_off"]:m["w2_off"] + d_h, 0:d_out]
            xb = x_f32.astype(wf.dtype)                    # single f32->bf16 cast / block
            fused = (jnp.dot(xb, wf, preferred_element_type=jnp.float32)
                     + vec(m["bf_row"], d_h + d_out))      # [rows, d_h + d_out]
            hid = jnp.maximum(fused[:, :d_h], 0.0)         # ReLU(hidden part)
            skip = fused[:, d_h:]                          # skip part
            dense = (jnp.dot(hid.astype(w2.dtype), w2,
                             preferred_element_type=jnp.float32)
                     + vec(m["b2_row"], d_out))
            o = dense + skip
            # LayerNorm (single pass, variance guarded against f32 cancellation)
            inv_d = 1.0 / d_out
            mean = jnp.sum(o, axis=-1, keepdims=True) * inv_d
            var = jnp.sum(o * o, axis=-1, keepdims=True) * inv_d - mean * mean
            var = jnp.maximum(var, 0.0)
            o = (o - mean) * jax.lax.rsqrt(var + 1e-5)
            return o * vec(m["gm_row"], d_out) + vec(m["bt_row"], d_out)

        # ---- dense decoder: stack of TideBlocks, activations stay on-chip ----
        g = e_ref[...]                                     # [B, enc_dim] f32
        for m in block_metas[:-1]:
            g = tide_block(g, m)

        # ---- 'b (h p) -> (b h) p' restructure + covariate append, done with static
        #      slices / single-row VMEM stores (no unsupported reshape, no per-h math) --
        proj = cov_ref.shape[-1]
        xt_ref[:, p_feat:p_feat + proj] = cov_ref[...]     # cov rows already (b h) order
        for b in range(batch):
            for h in range(pred_len):
                r = b * pred_len + h
                xt_ref[r:r + 1, 0:p_feat] = g[b:b + 1, h * p_feat:(h + 1) * p_feat]

        # ---- temporal decoder: ONE batched block over all B*pred_len rows ----
        out = tide_block(xt_ref[...], block_metas[-1]) + res_ref[...]
        o_ref[...] = out.astype(o_ref.dtype)               # single store

    return kernel


# ----------------------------------------------------------------------------
# Deterministic parameter construction (mirrors nn.Linear / nn.LayerNorm init)
# ----------------------------------------------------------------------------
def _init_linear(key, d_in, d_out, w_dtype=jnp.bfloat16):
    k_w, k_b = jax.random.split(key)
    bound = 1.0 / math.sqrt(d_in)
    w = jax.random.uniform(k_w, (d_in, d_out), jnp.float32, -bound, bound).astype(w_dtype)
    b = jax.random.uniform(k_b, (1, d_out), jnp.float32, -bound, bound)
    return w, b


def _auto_hidden_dim(d_in, d_out, hidden_dim):
    if hidden_dim != 0:
        return hidden_dim
    return int(round(2.0 ** (math.log2(d_in) / 2.0 + math.log2(d_out) / 2.0)))


def init_tide_block(key, d_in, d_out, hidden_dim=0):
    d_h = _auto_hidden_dim(d_in, d_out, hidden_dim)
    k1, k2, k3 = jax.random.split(key, 3)
    w1, b1 = _init_linear(k1, d_in, d_h)
    w2, b2 = _init_linear(k2, d_h, d_out)
    ws, bs = _init_linear(k3, d_in, d_out)
    gamma = jnp.ones((1, d_out), jnp.float32)
    beta = jnp.zeros((1, d_out), jnp.float32)
    return (w1, b1, w2, b2, ws, bs, gamma, beta)


# ----------------------------------------------------------------------------
# StackOut_Decoder forward (single fused pallas_call, packed weights)
# ----------------------------------------------------------------------------
class StackOutDecoderPallas:
    def __init__(self, key, seq_len, pred_len, lookback_dim, encoder_output_dim,
                 projector_output_dim, decoder_output_dim, decoder_intmlp_dims,
                 decoder_hidden_dims=(), tempor_hidden_dim=0):
        self.seq_len = seq_len          # stored but unused in forward (as in reference)
        self.pred_len = pred_len
        self.lookback_dim = lookback_dim
        self.proj_dim = projector_output_dim

        all_dims = [encoder_output_dim] + list(decoder_intmlp_dims) + [decoder_output_dim]
        n_blocks = len(all_dims) - 1
        keys = jax.random.split(key, n_blocks + 1)

        def _hd(i):
            # mirrors the reference get_bh_dim (including its 1-based indexing)
            if not hasattr(decoder_hidden_dims, '__iter__'):
                return decoder_hidden_dims
            return decoder_hidden_dims[i] if len(decoder_hidden_dims) > 0 else 0

        self.decoder_params = [
            init_tide_block(keys[i - 1], all_dims[i - 1], all_dims[i], _hd(i))
            for i in range(1, len(all_dims))
        ]

        # TODO(synk): the reference __init__ sizes tempor with projector_output_dim +
        # decoder_output_dim, which only matches the tensor the forward pass feeds it
        # when pred_len == 1; we size it by the per-step feature dim so forward runs
        # for any pred_len.
        self.p_feat = decoder_output_dim // pred_len
        tempor_in = projector_output_dim + self.p_feat
        self.tempor_params = init_tide_block(keys[-1], tempor_in, lookback_dim,
                                             tempor_hidden_dim)

        # ---- column-fuse W1|Ws (and b1|bs) and pack everything into two buffers ----
        w_blocks, v_blocks, metas = [], [], []
        for (w1, b1, w2, b2, ws, bs, gm, bt) in self.decoder_params + [self.tempor_params]:
            d_in, d_h = w1.shape
            d_out = w2.shape[1]
            m = dict(d_in=int(d_in), d_h=int(d_h), d_out=int(d_out))
            m["wf_idx"] = len(w_blocks); w_blocks.append(jnp.concatenate([w1, ws], axis=1))
            m["w2_idx"] = len(w_blocks); w_blocks.append(w2)
            m["bf_row"] = len(v_blocks); v_blocks.append(jnp.concatenate([b1, bs], axis=1))
            m["b2_row"] = len(v_blocks); v_blocks.append(b2)
            m["gm_row"] = len(v_blocks); v_blocks.append(gm)
            m["bt_row"] = len(v_blocks); v_blocks.append(bt)
            metas.append(m)

        offs, rows = [], 0
        for w in w_blocks:
            offs.append(rows)
            rows += _round_up(w.shape[0], _W_ROW_ALIGN)
        wbuf = jnp.zeros((_round_up(rows, _W_ROW_ALIGN), _LANES), jnp.bfloat16)
        for w, off in zip(w_blocks, offs):
            wbuf = wbuf.at[off:off + w.shape[0], :w.shape[1]].set(w.astype(jnp.bfloat16))

        vbuf = jnp.zeros((_round_up(len(v_blocks), 8), _LANES), jnp.float32)
        for i, v in enumerate(v_blocks):
            vbuf = vbuf.at[i, :v.shape[-1]].set(v.reshape(-1))

        for m in metas:
            m["wf_off"] = offs[m.pop("wf_idx")]
            m["w2_off"] = offs[m.pop("w2_idx")]

        self.wbuf, self.vbuf, self.block_metas = wbuf, vbuf, metas
        self._cache = {}

    def _build(self, batch):
        fn = self._cache.get(batch)
        if fn is not None:
            return fn
        kernel = _make_fused_kernel(self.block_metas, batch, self.pred_len, self.p_feat)
        vmem = pl.BlockSpec(memory_space=pltpu.MemorySpace.VMEM)
        call = pl.pallas_call(
            kernel,
            out_shape=jax.ShapeDtypeStruct((batch * self.pred_len, self.lookback_dim),
                                           jnp.float32),
            in_specs=[vmem] * 5,
            out_specs=vmem,
            scratch_shapes=[pltpu.VMEM((batch * self.pred_len,
                                        self.p_feat + self.proj_dim), jnp.float32)],
        )

        def fwd(e, cov, res, wbuf, vbuf):
            # free row-major flattens: rows are already in (b h) order, no transposes
            cov2 = cov.reshape(batch * self.pred_len, self.proj_dim)
            res2 = res.reshape(batch * self.pred_len, self.lookback_dim)
            out2 = call(e, cov2, res2, wbuf, vbuf)
            return out2.reshape(batch, self.pred_len, self.lookback_dim)

        fn = jax.jit(fwd)
        self._cache[batch] = fn
        return fn

    def __call__(self, e, covariate_future, residual):
        assert covariate_future.shape[-1] == self.proj_dim
        assert residual.shape[-1] == self.lookback_dim
        fn = self._build(e.shape[0])
        return fn(e, covariate_future, residual, self.wbuf, self.vbuf)


# ----------------------------------------------------------------------------
# Pure-JAX reference (same unfused params / dtypes) for a correctness check
# ----------------------------------------------------------------------------
def _reference_forward(model, e, covariate_future, residual):
    def block(x, p):
        w1, b1, w2, b2, ws, bs, gm, bt = p
        xb = x.astype(w1.dtype)
        h = jnp.maximum(jnp.dot(xb, w1, preferred_element_type=jnp.float32) + b1, 0.0)
        d = jnp.dot(h.astype(w2.dtype), w2, preferred_element_type=jnp.float32) + b2
        s = jnp.dot(xb, ws, preferred_element_type=jnp.float32) + bs
        o = d + s
        mean = jnp.mean(o, axis=-1, keepdims=True)
        var = jnp.mean((o - mean) ** 2, axis=-1, keepdims=True)
        return (o - mean) * jax.lax.rsqrt(var + 1e-5) * gm + bt

    g = e.astype(jnp.float32)
    for p in model.decoder_params:
        g = block(g, p)
    B = e.shape[0]
    g3 = g.reshape(B, model.pred_len, model.p_feat)
    stacked = jnp.concatenate([g3, covariate_future], axis=-1)
    x2 = stacked.reshape(-1, stacked.shape[-1])
    dec = block(x2, model.tempor_params)
    return dec.reshape(B, model.pred_len, -1) + residual


if __name__ == "__main__":
    key = jax.random.PRNGKey(0)
    k_param, k_e, k_cov, k_res = jax.random.split(key, 4)

    B = 2
    SEQ_LEN = 8
    PRED_LEN = 4
    LOOKBACK_DIM = 16
    ENCODER_OUT = 32
    PROJECTOR_OUT = 8
    DECODER_OUT = 64          # -> 16 per-step features after the rearrange
    INTMLP_DIMS = [24]

    model = StackOutDecoderPallas(
        k_param, SEQ_LEN, PRED_LEN, LOOKBACK_DIM, ENCODER_OUT, PROJECTOR_OUT,
        DECODER_OUT, INTMLP_DIMS, decoder_hidden_dims=[], tempor_hidden_dim=0)

    e = jax.random.normal(k_e, (B, ENCODER_OUT), jnp.float32)
    covariate_future = jax.random.normal(k_cov, (B, PRED_LEN, PROJECTOR_OUT), jnp.float32)
    residual = jax.random.normal(k_res, (B, PRED_LEN, LOOKBACK_DIM), jnp.float32)

    out = model(e, covariate_future, residual)
    out = jax.block_until_ready(out)

    assert out.shape == (B, PRED_LEN, LOOKBACK_DIM), out.shape
    assert bool(jnp.all(jnp.isfinite(out)))
    ref = _reference_forward(model, e, covariate_future, residual)
    assert bool(jnp.allclose(out, ref, atol=2e-3, rtol=2e-3)), \
        float(jnp.max(jnp.abs(out - ref)))
    print("KERNEL_OK")
</pallas_src>

<mosaic_0001>
module attributes {stable_mosaic.version = 11 : i64} {
  func.func @kernel(%arg0: memref<2x32xf32, #tpu.memory_space<vmem>>, %arg1: memref<8x8xf32, #tpu.memory_space<vmem>>, %arg2: memref<8x16xf32, #tpu.memory_space<vmem>>, %arg3: memref<208x128xbf16, #tpu.memory_space<vmem>>, %arg4: memref<16x128xf32, #tpu.memory_space<vmem>>, %arg5: memref<8x16xf32, #tpu.memory_space<vmem>>, %arg6: memref<8x24xf32, #tpu.memory_space<vmem>>) attributes {dimension_semantics = [], scalar_prefetch = 0 : i64, scratch_operands = 1 : i64, tpu.core_type = #tpu.core_type<tc>} {
    %c0 = arith.constant 0 : index
    %c0_0 = arith.constant 0 : index
    %0 = vector.load %arg4[%c0, %c0_0] : memref<16x128xf32, #tpu.memory_space<vmem>>, vector<16x128xf32>
    %c0_1 = arith.constant 0 : index
    %c0_2 = arith.constant 0 : index
    %1 = vector.load %arg0[%c0_1, %c0_2] : memref<2x32xf32, #tpu.memory_space<vmem>>, vector<2x32xf32>
    %c0_3 = arith.constant 0 : index
    %c0_4 = arith.constant 0 : index
    %2 = vector.load %arg3[%c0_3, %c0_4] : memref<208x128xbf16, #tpu.memory_space<vmem>>, vector<32x52xbf16>
    %c32 = arith.constant 32 : index
    %c0_5 = arith.constant 0 : index
    %3 = vector.load %arg3[%c32, %c0_5] : memref<208x128xbf16, #tpu.memory_space<vmem>>, vector<28x24xbf16>
    %4 = arith.truncf %1 : vector<2x32xf32> to vector<2x32xbf16>
    %cst = arith.constant dense<0.000000e+00> : vector<2x52xf32>
    %5 = tpu.matmul %4, %2, %cst {dimension_numbers = #tpu.dot_dimension_numbers<[1], [0], [0], [1], [0, 0, 1, 1], [], []>} : vector<2x32xbf16>, vector<32x52xbf16>, vector<2x52xf32> -> vector<2x52xf32>
    %6 = vector.extract_strided_slice %0 {offsets = [0, 0], sizes = [1, 52], strides = [1, 1]} : vector<16x128xf32> to vector<1x52xf32>
    %7 = vector.broadcast %6 : vector<1x52xf32> to vector<2x52xf32>
    %8 = arith.addf %5, %7 : vector<2x52xf32>
    %9 = vector.extract_strided_slice %8 {offsets = [0, 0], sizes = [2, 28], strides = [1, 1]} : vector<2x52xf32> to vector<2x28xf32>
    %cst_6 = arith.constant 0.000000e+00 : f32
    %10 = vector.broadcast %cst_6 : f32 to vector<2x28xf32>
    %11 = arith.maximumf %9, %10 : vector<2x28xf32>
    %12 = vector.extract_strided_slice %8 {offsets = [0, 28], sizes = [2, 24], strides = [1, 1]} : vector<2x52xf32> to vector<2x24xf32>
    %13 = arith.truncf %11 : vector<2x28xf32> to vector<2x28xbf16>
    %cst_7 = arith.constant dense<0.000000e+00> : vector<2x24xf32>
    %14 = tpu.matmul %13, %3, %cst_7 {dimension_numbers = #tpu.dot_dimension_numbers<[1], [0], [0], [1], [0, 0, 1, 1], [], []>} : vector<2x28xbf16>, vector<28x24xbf16>, vector<2x24xf32> -> vector<2x24xf32>
    %15 = vector.extract_strided_slice %0 {offsets = [1, 0], sizes = [1, 24], strides = [1, 1]} : vector<16x128xf32> to vector<1x24xf32>
    %16 = vector.broadcast %15 : vector<1x24xf32> to vector<2x24xf32>
    %17 = arith.addf %14, %16 : vector<2x24xf32>
    %18 = arith.addf %17, %12 : vector<2x24xf32>
    %cst_8 = arith.constant dense<0.000000e+00> : vector<2xf32>
    %19 = vector.multi_reduction <add>, %18, %cst_8 [1] : vector<2x24xf32> to vector<2xf32>
    %20 = vector.shape_cast %19 : vector<2xf32> to vector<2x1xf32>
    %cst_9 = arith.constant 0.0416666679 : f32
    %21 = vector.broadcast %cst_9 : f32 to vector<2x1xf32>
    %22 = arith.mulf %20, %21 : vector<2x1xf32>
    %23 = arith.mulf %18, %18 : vector<2x24xf32>
    %cst_10 = arith.constant dense<0.000000e+00> : vector<2xf32>
    %24 = vector.multi_reduction <add>, %23, %cst_10 [1] : vector<2x24xf32> to vector<2xf32>
    %25 = vector.shape_cast %24 : vector<2xf32> to vector<2x1xf32>
    %cst_11 = arith.constant 0.0416666679 : f32
    %26 = vector.broadcast %cst_11 : f32 to vector<2x1xf32>
    %27 = arith.mulf %25, %26 : vector<2x1xf32>
    %28 = arith.mulf %22, %22 : vector<2x1xf32>
    %29 = arith.subf %27, %28 : vector<2x1xf32>
    %cst_12 = arith.constant 0.000000e+00 : f32
    %30 = vector.broadcast %cst_12 : f32 to vector<2x1xf32>
    %31 = arith.maximumf %29, %30 : vector<2x1xf32>
    %32 = vector.broadcast %22 : vector<2x1xf32> to vector<2x24xf32>
    %33 = arith.subf %18, %32 : vector<2x24xf32>
    %cst_13 = arith.constant 9.99999974E-6 : f32
    %34 = vector.broadcast %cst_13 : f32 to vector<2x1xf32>
    %35 = arith.addf %31, %34 : vector<2x1xf32>
    %36 = math.rsqrt %35 : vector<2x1xf32>
    %37 = vector.broadcast %36 : vector<2x1xf32> to vector<2x24xf32>
    %38 = arith.mulf %33, %37 : vector<2x24xf32>
    %39 = vector.extract_strided_slice %0 {offsets = [2, 0], sizes = [1, 24], strides = [1, 1]} : vector<16x128xf32> to vector<1x24xf32>
    %40 = vector.broadcast %39 : vector<1x24xf32> to vector<2x24xf32>
    %41 = arith.mulf %38, %40 : vector<2x24xf32>
    %42 = vector.extract_strided_slice %0 {offsets = [3, 0], sizes = [1, 24], strides = [1, 1]} : vector<16x128xf32> to vector<1x24xf32>
    %43 = vector.broadcast %42 : vector<1x24xf32> to vector<2x24xf32>
    %44 = arith.addf %41, %43 : vector<2x24xf32>
    %c64 = arith.constant 64 : index
    %c0_14 = arith.constant 0 : index
    %45 = vector.load %arg3[%c64, %c0_14] : memref<208x128xbf16, #tpu.memory_space<vmem>>, vector<24x103xbf16>
    %c96 = arith.constant 96 : index
    %c0_15 = arith.constant 0 : index
    %46 = vector.load %arg3[%c96, %c0_15] : memref<208x128xbf16, #tpu.memory_space<vmem>>, vector<39x64xbf16>
    %47 = arith.truncf %44 : vector<2x24xf32> to vector<2x24xbf16>
    %cst_16 = arith.constant dense<0.000000e+00> : vector<2x103xf32>
    %48 = tpu.matmul %47, %45, %cst_16 {dimension_numbers = #tpu.dot_dimension_numbers<[1], [0], [0], [1], [0, 0, 1, 1], [], []>} : vector<2x24xbf16>, vector<24x103xbf16>, vector<2x103xf32> -> vector<2x103xf32>
    %49 = vector.extract_strided_slice %0 {offsets = [4, 0], sizes = [1, 103], strides = [1, 1]} : vector<16x128xf32> to vector<1x103xf32>
    %50 = vector.broadcast %49 : vector<1x103xf32> to vector<2x103xf32>
    %51 = arith.addf %48, %50 : vector<2x103xf32>
    %52 = vector.extract_strided_slice %51 {offsets = [0, 0], sizes = [2, 39], strides = [1, 1]} : vector<2x103xf32> to vector<2x39xf32>
    %cst_17 = arith.constant 0.000000e+00 : f32
    %53 = vector.broadcast %cst_17 : f32 to vector<2x39xf32>
    %54 = arith.maximumf %52, %53 : vector<2x39xf32>
    %55 = vector.extract_strided_slice %51 {offsets = [0, 39], sizes = [2, 64], strides = [1, 1]} : vector<2x103xf32> to vector<2x64xf32>
    %56 = arith.truncf %54 : vector<2x39xf32> to vector<2x39xbf16>
    %cst_18 = arith.constant dense<0.000000e+00> : vector<2x64xf32>
    %57 = tpu.matmul %56, %46, %cst_18 {dimension_numbers = #tpu.dot_dimension_numbers<[1], [0], [0], [1], [0, 0, 1, 1], [], []>} : vector<2x39xbf16>, vector<39x64xbf16>, vector<2x64xf32> -> vector<2x64xf32>
    %58 = vector.extract_strided_slice %0 {offsets = [5, 0], sizes = [1, 64], strides = [1, 1]} : vector<16x128xf32> to vector<1x64xf32>
    %59 = vector.broadcast %58 : vector<1x64xf32> to vector<2x64xf32>
    %60 = arith.addf %57, %59 : vector<2x64xf32>
    %61 = arith.addf %60, %55 : vector<2x64xf32>
    %cst_19 = arith.constant dense<0.000000e+00> : vector<2xf32>
    %62 = vector.multi_reduction <add>, %61, %cst_19 [1] : vector<2x64xf32> to vector<2xf32>
    %63 = vector.shape_cast %62 : vector<2xf32> to vector<2x1xf32>
    %cst_20 = arith.constant 1.562500e-02 : f32
    %64 = vector.broadcast %cst_20 : f32 to vector<2x1xf32>
    %65 = arith.mulf %63, %64 : vector<2x1xf32>
    %66 = arith.mulf %61, %61 : vector<2x64xf32>
    %cst_21 = arith.constant dense<0.000000e+00> : vector<2xf32>
    %67 = vector.multi_reduction <add>, %66, %cst_21 [1] : vector<2x64xf32> to vector<2xf32>
    %68 = vector.shape_cast %67 : vector<2xf32> to vector<2x1xf32>
    %cst_22 = arith.constant 1.562500e-02 : f32
    %69 = vector.broadcast %cst_22 : f32 to vector<2x1xf32>
    %70 = arith.mulf %68, %69 : vector<2x1xf32>
    %71 = arith.mulf %65, %65 : vector<2x1xf32>
    %72 = arith.subf %70, %71 : vector<2x1xf32>
    %cst_23 = arith.constant 0.000000e+00 : f32
    %73 = vector.broadcast %cst_23 : f32 to vector<2x1xf32>
    %74 = arith.maximumf %72, %73 : vector<2x1xf32>
    %75 = vector.broadcast %65 : vector<2x1xf32> to vector<2x64xf32>
    %76 = arith.subf %61, %75 : vector<2x64xf32>
    %cst_24 = arith.constant 9.99999974E-6 : f32
    %77 = vector.broadcast %cst_24 : f32 to vector<2x1xf32>
    %78 = arith.addf %74, %77 : vector<2x1xf32>
    %79 = math.rsqrt %78 : vector<2x1xf32>
    %80 = vector.broadcast %79 : vector<2x1xf32> to vector<2x64xf32>
    %81 = arith.mulf %76, %80 : vector<2x64xf32>
    %82 = vector.extract_strided_slice %0 {offsets = [6, 0], sizes = [1, 64], strides = [1, 1]} : vector<16x128xf32> to vector<1x64xf32>
    %83 = vector.broadcast %82 : vector<1x64xf32> to vector<2x64xf32>
    %84 = arith.mulf %81, %83 : vector<2x64xf32>
    %85 = vector.extract_strided_slice %0 {offsets = [7, 0], sizes = [1, 64], strides = [1, 1]} : vector<16x128xf32> to vector<1x64xf32>
    %86 = vector.broadcast %85 : vector<1x64xf32> to vector<2x64xf32>
    %87 = arith.addf %84, %86 : vector<2x64xf32>
    %c0_25 = arith.constant 0 : index
    %c0_26 = arith.constant 0 : index
    %88 = vector.load %arg1[%c0_25, %c0_26] : memref<8x8xf32, #tpu.memory_space<vmem>>, vector<8x8xf32>
    %c0_27 = arith.constant 0 : index
    %c16 = arith.constant 16 : index
    %89 = vector.load %arg6[%c0_27, %c16] : memref<8x24xf32, #tpu.memory_space<vmem>>, vector<8x8xf32>
    tpu.vector_store %arg6[%c0_27, %c16], %88 {strides = array<i32>} : memref<8x24xf32, #tpu.memory_space<vmem>>, vector<8x8xf32>,
    %90 = vector.extract_strided_slice %87 {offsets = [0, 0], sizes = [1, 16], strides = [1, 1]} : vector<2x64xf32> to vector<1x16xf32>
    %c0_28 = arith.constant 0 : index
    %c0_29 = arith.constant 0 : index
    %91 = vector.load %arg6[%c0_28, %c0_29] : memref<8x24xf32, #tpu.memory_space<vmem>>, vector<1x16xf32>
    tpu.vector_store %arg6[%c0_28, %c0_29], %90 {strides = array<i32>} : memref<8x24xf32, #tpu.memory_space<vmem>>, vector<1x16xf32>,
    %92 = vector.extract_strided_slice %87 {offsets = [0, 16], sizes = [1, 16], strides = [1, 1]} : vector<2x64xf32> to vector<1x16xf32>
    %c1 = arith.constant 1 : index
    %c0_30 = arith.constant 0 : index
    %93 = vector.load %arg6[%c1, %c0_30] : memref<8x24xf32, #tpu.memory_space<vmem>>, vector<1x16xf32>
    tpu.vector_store %arg6[%c1, %c0_30], %92 {strides = array<i32>} : memref<8x24xf32, #tpu.memory_space<vmem>>, vector<1x16xf32>,
    %94 = vector.extract_strided_slice %87 {offsets = [0, 32], sizes = [1, 16], strides = [1, 1]} : vector<2x64xf32> to vector<1x16xf32>
    %c2 = arith.constant 2 : index
    %c0_31 = arith.constant 0 : index
    %95 = vector.load %arg6[%c2, %c0_31] : memref<8x24xf32, #tpu.memory_space<vmem>>, vector<1x16xf32>
    tpu.vector_store %arg6[%c2, %c0_31], %94 {strides = array<i32>} : memref<8x24xf32, #tpu.memory_space<vmem>>, vector<1x16xf32>,
    %96 = vector.extract_strided_slice %87 {offsets = [0, 48], sizes = [1, 16], strides = [1, 1]} : vector<2x64xf32> to vector<1x16xf32>
    %c3 = arith.constant 3 : index
    %c0_32 = arith.constant 0 : index
    %97 = vector.load %arg6[%c3, %c0_32] : memref<8x24xf32, #tpu.memory_space<vmem>>, vector<1x16xf32>
    tpu.vector_store %arg6[%c3, %c0_32], %96 {strides = array<i32>} : memref<8x24xf32, #tpu.memory_space<vmem>>, vector<1x16xf32>,
    %98 = vector.extract_strided_slice %87 {offsets = [1, 0], sizes = [1, 16], strides = [1, 1]} : vector<2x64xf32> to vector<1x16xf32>
    %c4 = arith.constant 4 : index
    %c0_33 = arith.constant 0 : index
    %99 = vector.load %arg6[%c4, %c0_33] : memref<8x24xf32, #tpu.memory_space<vmem>>, vector<1x16xf32>
    tpu.vector_store %arg6[%c4, %c0_33], %98 {strides = array<i32>} : memref<8x24xf32, #tpu.memory_space<vmem>>, vector<1x16xf32>,
    %100 = vector.extract_strided_slice %87 {offsets = [1, 16], sizes = [1, 16], strides = [1, 1]} : vector<2x64xf32> to vector<1x16xf32>
    %c5 = arith.constant 5 : index
    %c0_34 = arith.constant 0 : index
    %101 = vector.load %arg6[%c5, %c0_34] : memref<8x24xf32, #tpu.memory_space<vmem>>, vector<1x16xf32>
    tpu.vector_store %arg6[%c5, %c0_34], %100 {strides = array<i32>} : memref<8x24xf32, #tpu.memory_space<vmem>>, vector<1x16xf32>,
    %102 = vector.extract_strided_slice %87 {offsets = [1, 32], sizes = [1, 16], strides = [1, 1]} : vector<2x64xf32> to vector<1x16xf32>
    %c6 = arith.constant 6 : index
    %c0_35 = arith.constant 0 : index
    %103 = vector.load %arg6[%c6, %c0_35] : memref<8x24xf32, #tpu.memory_space<vmem>>, vector<1x16xf32>
    tpu.vector_store %arg6[%c6, %c0_35], %102 {strides = array<i32>} : memref<8x24xf32, #tpu.memory_space<vmem>>, vector<1x16xf32>,
    %104 = vector.extract_strided_slice %87 {offsets = [1, 48], sizes = [1, 16], strides = [1, 1]} : vector<2x64xf32> to vector<1x16xf32>
    %c7 = arith.constant 7 : index
    %c0_36 = arith.constant 0 : index
    %105 = vector.load %arg6[%c7, %c0_36] : memref<8x24xf32, #tpu.memory_space<vmem>>, vector<1x16xf32>
    tpu.vector_store %arg6[%c7, %c0_36], %104 {strides = array<i32>} : memref<8x24xf32, #tpu.memory_space<vmem>>, vector<1x16xf32>,
    %c0_37 = arith.constant 0 : index
    %c0_38 = arith.constant 0 : index
    %106 = vector.load %arg6[%c0_37, %c0_38] : memref<8x24xf32, #tpu.memory_space<vmem>>, vector<8x24xf32>
    %c144 = arith.constant 144 : index
    %c0_39 = arith.constant 0 : index
    %107 = vector.load %arg3[%c144, %c0_39] : memref<208x128xbf16, #tpu.memory_space<vmem>>, vector<24x36xbf16>
    %c176 = arith.constant 176 : index
    %c0_40 = arith.constant 0 : index
    %108 = vector.load %arg3[%c176, %c0_40] : memref<208x128xbf16, #tpu.memory_space<vmem>>, vector<20x16xbf16>
    %109 = arith.truncf %106 : vector<8x24xf32> to vector<8x24xbf16>
    %cst_41 = arith.constant dense<0.000000e+00> : vector<8x36xf32>
    %110 = tpu.matmul %109, %107, %cst_41 {dimension_numbers = #tpu.dot_dimension_numbers<[1], [0], [0], [1], [0, 0, 1, 1], [], []>} : vector<8x24xbf16>, vector<24x36xbf16>, vector<8x36xf32> -> vector<8x36xf32>
    %111 = vector.extract_strided_slice %0 {offsets = [8, 0], sizes = [1, 36], strides = [1, 1]} : vector<16x128xf32> to vector<1x36xf32>
    %112 = vector.broadcast %111 : vector<1x36xf32> to vector<8x36xf32>
    %113 = arith.addf %110, %112 : vector<8x36xf32>
    %114 = vector.extract_strided_slice %113 {offsets = [0, 0], sizes = [8, 20], strides = [1, 1]} : vector<8x36xf32> to vector<8x20xf32>
    %cst_42 = arith.constant 0.000000e+00 : f32
    %115 = vector.broadcast %cst_42 : f32 to vector<8x20xf32>
    %116 = arith.maximumf %114, %115 : vector<8x20xf32>
    %117 = vector.extract_strided_slice %113 {offsets = [0, 20], sizes = [8, 16], strides = [1, 1]} : vector<8x36xf32> to vector<8x16xf32>
    %118 = arith.truncf %116 : vector<8x20xf32> to vector<8x20xbf16>
    %cst_43 = arith.constant dense<0.000000e+00> : vector<8x16xf32>
    %119 = tpu.matmul %118, %108, %cst_43 {dimension_numbers = #tpu.dot_dimension_numbers<[1], [0], [0], [1], [0, 0, 1, 1], [], []>} : vector<8x20xbf16>, vector<20x16xbf16>, vector<8x16xf32> -> vector<8x16xf32>
    %120 = vector.extract_strided_slice %0 {offsets = [9, 0], sizes = [1, 16], strides = [1, 1]} : vector<16x128xf32> to vector<1x16xf32>
    %121 = vector.broadcast %120 : vector<1x16xf32> to vector<8x16xf32>
    %122 = arith.addf %119, %121 : vector<8x16xf32>
    %123 = arith.addf %122, %117 : vector<8x16xf32>
    %cst_44 = arith.constant dense<0.000000e+00> : vector<8xf32>
    %124 = vector.multi_reduction <add>, %123, %cst_44 [1] : vector<8x16xf32> to vector<8xf32>
    %125 = vector.shape_cast %124 : vector<8xf32> to vector<8x1xf32>
    %cst_45 = arith.constant 6.250000e-02 : f32
    %126 = vector.broadcast %cst_45 : f32 to vector<8x1xf32>
    %127 = arith.mulf %125, %126 : vector<8x1xf32>
    %128 = arith.mulf %123, %123 : vector<8x16xf32>
    %cst_46 = arith.constant dense<0.000000e+00> : vector<8xf32>
    %129 = vector.multi_reduction <add>, %128, %cst_46 [1] : vector<8x16xf32> to vector<8xf32>
    %130 = vector.shape_cast %129 : vector<8xf32> to vector<8x1xf32>
    %cst_47 = arith.constant 6.250000e-02 : f32
    %131 = vector.broadcast %cst_47 : f32 to vector<8x1xf32>
    %132 = arith.mulf %130, %131 : vector<8x1xf32>
    %133 = arith.mulf %127, %127 : vector<8x1xf32>
    %134 = arith.subf %132, %133 : vector<8x1xf32>
    %cst_48 = arith.constant 0.000000e+00 : f32
    %135 = vector.broadcast %cst_48 : f32 to vector<8x1xf32>
    %136 = arith.maximumf %134, %135 : vector<8x1xf32>
    %137 = vector.broadcast %127 : vector<8x1xf32> to vector<8x16xf32>
    %138 = arith.subf %123, %137 : vector<8x16xf32>
    %cst_49 = arith.constant 9.99999974E-6 : f32
    %139 = vector.broadcast %cst_49 : f32 to vector<8x1xf32>
    %140 = arith.addf %136, %139 : vector<8x1xf32>
    %141 = math.rsqrt %140 : vector<8x1xf32>
    %142 = vector.broadcast %141 : vector<8x1xf32> to vector<8x16xf32>
    %143 = arith.mulf %138, %142 : vector<8x16xf32>
    %144 = vector.extract_strided_slice %0 {offsets = [10, 0], sizes = [1, 16], strides = [1, 1]} : vector<16x128xf32> to vector<1x16xf32>
    %145 = vector.broadcast %144 : vector<1x16xf32> to vector<8x16xf32>
    %146 = arith.mulf %143, %145 : vector<8x16xf32>
    %147 = vector.extract_strided_slice %0 {offsets = [11, 0], sizes = [1, 16], strides = [1, 1]} : vector<16x128xf32> to vector<1x16xf32>
    %148 = vector.broadcast %147 : vector<1x16xf32> to vector<8x16xf32>
    %149 = arith.addf %146, %148 : vector<8x16xf32>
    %c0_50 = arith.constant 0 : index
    %c0_51 = arith.constant 0 : index
    %150 = vector.load %arg2[%c0_50, %c0_51] : memref<8x16xf32, #tpu.memory_space<vmem>>, vector<8x16xf32>
    %151 = arith.addf %149, %150 : vector<8x16xf32>
    %c0_52 = arith.constant 0 : index
    %c0_53 = arith.constant 0 : index
    %152 = vector.load %arg5[%c0_52, %c0_53] : memref<8x16xf32, #tpu.memory_space<vmem>>, vector<8x16xf32>
    tpu.vector_store %arg5[%c0_52, %c0_53], %151 {strides = array<i32>} : memref<8x16xf32, #tpu.memory_space<vmem>>, vector<8x16xf32>,
    return
  }
}

</mosaic_0001>

<llo_original>
// kernel: fwd.1
$region0: #{fwd.1}
  #allocation0 [shape = 'u32[]', space=smem, size = 0x4, offset = 0x4, fixed_abs, tag = 'smem constant byte address 0x4 - core index']
  #allocation1 [shape = 'u32[144,128]{1,0:T(1,128)}', space=vmem, size = 0x12000, scoped, tag = 'internal scratch']
  #allocation2 [shape = 'f32[8,24]{1,0:T(8,128)}', space=vmem, size = 0x1000, scoped, tag = 'scratch operand']
  %s0 = inlined_call_operand.vmem [shape: f32[2,32], index: 0, kind: input, shape index: {}]
  %s1 = inlined_call_operand.hbm [shape: f32[8,8], index: 1, kind: input, shape index: {}]
  %s2 = inlined_call_operand.hbm [shape: f32[8,16], index: 2, kind: input, shape index: {}]
  %s3 = inlined_call_operand.hbm [shape: bf16[208,128], index: 3, kind: input, shape index: {}]
  %s4 = inlined_call_operand.vmem [shape: f32[16,128], index: 4, kind: input, shape index: {}]
  %s5 = inlined_call_operand.hbm [shape: f32[8,16], index: 5, kind: output, shape index: {}]
  %s6 = sld [smem:[#allocation0]]
  $region42: #{fwd.1} parent=0
    _
  %s8 = ssub.s32 1, %s6
  %s9 = scalar_select 0, %s8, %s6
  $region1: #{fwd.1} parent=0
    #allocation3 [shape = 'u8[4096]{0}', space=vmem, size = 0x1000, scoped, tag = 'input window, operand 1, single buffered']
    #allocation4 [shape = 's32[1]{0}', space=sflag, size = 0x4, scoped, tag = 'scoped memory for fwd.1']
    #allocation5 [shape = 's32[1]{0}', space=sflag, size = 0x4, scoped, tag = 'scoped memory for fwd.1']
    #allocation6 [shape = 'u8[4096]{0}', space=vmem, size = 0x1000, scoped, tag = 'input window, operand 2, single buffered']
    #allocation7 [shape = 's32[1]{0}', space=sflag, size = 0x4, scoped, tag = 'scoped memory for fwd.1']
    #allocation8 [shape = 'u8[53248]{0}', space=vmem, size = 0xd000, scoped, tag = 'input window, operand 3, single buffered']
    #allocation9 [shape = 'u8[4096]{0}', space=vmem, size = 0x1000, scoped, tag = 'output window, operand 0, single buffered']
    %10 = vsyncpa [#allocation4], 0
    %11 = vsyncpa [#allocation7], 0
    %12 = vsyncpa [#allocation5], 0
    // Predicated region
    $region2: #{fwd.1} parent=1 // pred_check
      _
    $region3: #{fwd.1} parent=1 // pred_check_branch
      %14 = sbr.rel (0) target = $region5
    $region4: #{fwd.1} parent=1 // pred_region
      _
    $region5: #{fwd.1} parent=1 // pred_fallthru
      _
    // Predicated region
    $region6: #{fwd.1} parent=1 // pred_check
      _
    $region7: #{fwd.1} parent=1 // pred_check_branch
      %16 = sbr.rel (0) target = $region9
    $region8: #{fwd.1} parent=1 // pred_region
      %s18 = ssub.s32 128, 128
      %19 = vsyncadd [#allocation4], %s18
      %s21 = sshll.u32 [#allocation3], 4
      %s22 = int_to_ptr.vmem [resolvable:$true] %s21
      %24 = dma.hbm_to_vmem [thread:$0]  %s1, 128, %s22, [#allocation4]
    $region9: #{fwd.1} parent=1 // pred_fallthru
      _
    // Predicated region
    $region10: #{fwd.1} parent=1 // pred_check
      _
    $region11: #{fwd.1} parent=1 // pred_check_branch
      %26 = sbr.rel (0) target = $region13
    $region12: #{fwd.1} parent=1 // pred_region
      %s28 = ssub.s32 128, 128
      %29 = vsyncadd [#allocation7], %s28
      %s31 = sshll.u32 [#allocation6], 4
      %s32 = int_to_ptr.vmem [resolvable:$true] %s31
      %34 = dma.hbm_to_vmem [thread:$0]  %s2, 128, %s32, [#allocation7]
    $region13: #{fwd.1} parent=1 // pred_fallthru
      _
    // Predicated region
    $region14: #{fwd.1} parent=1 // pred_check
      _
    $region15: #{fwd.1} parent=1 // pred_check_branch
      %36 = sbr.rel (0) target = $region17
    $region16: #{fwd.1} parent=1 // pred_region
      %s38 = ssub.s32 1664, 1664
      %39 = vsyncadd [#allocation7], %s38
      %s40 = sshll.u32 [#allocation8], 4
      %s41 = int_to_ptr.vmem [resolvable:$true] %s40
      %46 = dma.hbm_to_vmem [thread:$0]  %s3, 1664, %s41, [#allocation7], 64, 64, 4
    $region17: #{fwd.1} parent=1 // pred_fallthru
      _
    // Predicated region
    $region18: #{fwd.1} parent=1 // pred_check
      _
    $region19: #{fwd.1} parent=1 // pred_check_branch
      %48 = sbr.rel (0) target = $region21
    $region20: #{fwd.1} parent=1 // pred_region
      _
    $region21: #{fwd.1} parent=1 // pred_fallthru
      _
    // Predicated region
    $region22: #{fwd.1} parent=1 // pred_check
      _
    $region23: #{fwd.1} parent=1 // pred_check_branch
      %50 = sbr.rel (0) target = $region25
    $region24: #{fwd.1} parent=1 // pred_region
      %51 = dma.done [#allocation4], 128
    $region25: #{fwd.1} parent=1 // pred_fallthru
      _
    // Predicated region
    $region26: #{fwd.1} parent=1 // pred_check
      _
    $region27: #{fwd.1} parent=1 // pred_check_branch
      %53 = sbr.rel (0) target = $region29
    $region28: #{fwd.1} parent=1 // pred_region
      %54 = dma.done [#allocation7], 128
    $region29: #{fwd.1} parent=1 // pred_fallthru
      _
    // Predicated region
    $region30: #{fwd.1} parent=1 // pred_check
      _
    $region31: #{fwd.1} parent=1 // pred_check_branch
      %56 = sbr.rel (0) target = $region33
    $region32: #{fwd.1} parent=1 // pred_region
      %57 = dma.done [#allocation7], 1664
    $region33: #{fwd.1} parent=1 // pred_fallthru
      _
    %v59 = vld [vmem:[%s4] sm:$0xff]
    %v60 = vld [vmem:[%s4 + $0x8] sm:$0xff]
    %v61 = vld [vmem:[%s0] sm:$0x3]
    %v62 = vld [vmem:[#allocation8] sm:$0xf]
    %v63 = vld [vmem:[#allocation8 + $0x4] sm:$0xf]
    %v64 = vld [vmem:[#allocation8 + $0x8] sm:$0xf]
    %v65 = vld [vmem:[#allocation8 + $0xc] sm:$0xf]
    %v66 = vld [vmem:[#allocation8 + $0x10] sm:$0xf]
    %v67 = vld [vmem:[#allocation8 + $0x14] sm:$0xf]
    %v68 = vld [vmem:[#allocation8 + $0x18] sm:$0xf]
    %v69 = vld [vmem:[#allocation8 + $0x1c] sm:$0x3]
    %v70 = vpack.c.bf16 %v61, %v61
    %v71 = vlaneseq
    %v72 = vshrl.u32 %v71, 7
    %v73 = vsub.s32 0, %v72
    %v74 = vrot.slane %v59, %v73
    %v79 = vunpack.c.l.b16 %v62
    %v80 = vunpack.c.l.b16 %v63
    %v81 = vunpack.c.l.b16 %v64
    %v82 = vunpack.c.l.b16 %v65
    %v83 = vpack.c.b16 %v80, %v79
    %v84 = vpack.c.b16 %v82, %v81
    %vm87 = vcmask 261120
    %v89 = vsel %vm87, %v70, 0
    %91 = vmatprep.subr.bf16.mxu0 0
    %92 = vmatpush1.bf16.msra.mxu0 %v83
    %93 = vmatprep.subr.bf16.mxu0 0
    %94 = vmatpush1.bf16.msra.mxu0 %v84
    %95 = vmatprep.subr.bf16.mxu0 0
    %96 = vmatpush1.bf16.msra.mxu0 0
    %97 = vmatprep.subr.bf16.mxu0 0
    %98 = vmatpush1.bf16.msra.mxu0 0
    %99 = vmatprep.subr.bf16.mxu0 0
    %100 = vmatpush1.bf16.msra.mxu0 0
    %101 = vmatprep.subr.bf16.mxu0 0
    %102 = vmatpush1.bf16.msra.mxu0 0
    %103 = vmatprep.subr.bf16.mxu0 0
    %104 = vmatpush1.bf16.msra.mxu0 0
    %105 = vmatprep.subr.bf16.mxu0 0
    %106 = vmatpush1.bf16.msra.mxu0 0
    %107 = vmatprep.subr.bf16.mxu0 0
    %108 = vmatpush1.bf16.msra.mxu0 0
    %109 = vmatprep.subr.bf16.mxu0 0
    %110 = vmatpush1.bf16.msra.mxu0 0
    %111 = vmatprep.subr.bf16.mxu0 0
    %112 = vmatpush1.bf16.msra.mxu0 0
    %113 = vmatprep.subr.bf16.mxu0 0
    %114 = vmatpush1.bf16.msra.mxu0 0
    %115 = vmatprep.subr.bf16.mxu0 0
    %116 = vmatpush1.bf16.msra.mxu0 0
    %117 = vmatprep.subr.bf16.mxu0 0
    %118 = vmatpush1.bf16.msra.mxu0 0
    %119 = vmatprep.subr.bf16.mxu0 0
    %120 = vmatpush1.bf16.msra.mxu0 0
    %121 = vmatprep.subr.bf16.mxu0 0
    %122 = vmatpush1.bf16.msra.mxu0 0
    %123 = vmatprep.mubr.bf16.mxu0 0
    %124 = vmatmul.mubr.bf16.gmra.mrb[0].mxu0 %v89
    %v125 = vpop.f32.mrb[0].mxu0
    %v126 = vadd.f32 %v74, %v125
    %v127 = vpop.f32.mrb[0].mxu0
    %v128 = vpop.f32.mrb[0].mxu0
    %v129 = vpop.f32.mrb[0].mxu0
    %130 = vdwg.mxu0
    %v131 = vmax.f32 %v126, 0.0
    %v132 = vpack.c.bf16 %v131, %v131
    %v133 = vlaneseq
    %v134 = vshrl.u32 %v133, 7
    %v135 = vsub.s32 1, %v134
    %v136 = vrot.slane %v59, %v135
    %v141 = vunpack.c.l.b16 %v66
    %v142 = vunpack.c.l.b16 %v67
    %v143 = vunpack.c.l.b16 %v68
    %v144 = vunpack.c.l.b16 %v69
    %v145 = vpack.c.b16 %v142, %v141
    %v146 = vpack.c.b16 %v144, %v143
    %vm148 = vcmask 228352
    %v150 = vsel %vm148, %v132, 0
    %vm152 = vcmask 1045504
    %v154 = vsel %vm152, %v146, 0
    %156 = vmatprep.subr.bf16.mxu0 0
    %157 = vmatpush1.bf16.msra.mxu0 %v145
    %158 = vmatprep.subr.bf16.mxu0 0
    %159 = vmatpush1.bf16.msra.mxu0 %v154
    %160 = vmatprep.subr.bf16.mxu0 0
    %161 = vmatpush1.bf16.msra.mxu0 0
    %162 = vmatprep.subr.bf16.mxu0 0
    %163 = vmatpush1.bf16.msra.mxu0 0
    %164 = vmatprep.subr.bf16.mxu0 0
    %165 = vmatpush1.bf16.msra.mxu0 0
    %166 = vmatprep.subr.bf16.mxu0 0
    %167 = vmatpush1.bf16.msra.mxu0 0
    %168 = vmatprep.subr.bf16.mxu0 0
    %169 = vmatpush1.bf16.msra.mxu0 0
    %170 = vmatprep.subr.bf16.mxu0 0
    %171 = vmatpush1.bf16.msra.mxu0 0
    %172 = vmatprep.subr.bf16.mxu0 0
    %173 = vmatpush1.bf16.msra.mxu0 0
    %174 = vmatprep.subr.bf16.mxu0 0
    %175 = vmatpush1.bf16.msra.mxu0 0
    %176 = vmatprep.subr.bf16.mxu0 0
    %177 = vmatpush1.bf16.msra.mxu0 0
    %178 = vmatprep.subr.bf16.mxu0 0
    %179 = vmatpush1.bf16.msra.mxu0 0
    %180 = vmatprep.subr.bf16.mxu0 0
    %181 = vmatpush1.bf16.msra.mxu0 0
    %182 = vmatprep.subr.bf16.mxu0 0
    %183 = vmatpush1.bf16.msra.mxu0 0
    %184 = vmatprep.subr.bf16.mxu0 0
    %185 = vmatpush1.bf16.msra.mxu0 0
    %186 = vmatprep.subr.bf16.mxu0 0
    %187 = vmatpush1.bf16.msra.mxu0 0
    %188 = vmatprep.mubr.bf16.mxu0 0
    %189 = vmatmul.mubr.bf16.gmra.mrb[0].mxu0 %v150
    %v190 = vpop.f32.mrb[0].mxu0
    %v191 = vadd.f32 %v136, %v190
    %v192 = vpop.f32.mrb[0].mxu0
    %v193 = vpop.f32.mrb[0].mxu0
    %v194 = vpop.f32.mrb[0].mxu0
    %195 = vdwg.mxu0
    %197 = vrot.lane.b32.xlu0 %v126, 100
    %v198 = vpop.permute.xlu0 %197
    %v200 = vadd.f32 %v191, %v198
    %vm201 = vcmask 189440
    %v202 = vsel %vm201, %v200, 0.0
    %203 = vadd.xlane.f32.xlu0 %v202
    %v204 = vpop.xlane.xlu0 %203
    %v205 = vmul.f32 %v204, 0.041666668
    %v206 = vmul.f32 %v200, %v200
    %v207 = vsel %vm201, %v206, 0.0
    %208 = vadd.xlane.f32.xlu0 %v207
    %v209 = vpop.xlane.xlu0 %208
    %v210 = vmul.f32 %v209, 0.041666668
    %v211 = vmul.f32 %v205, %v205
    %v212 = vsub.f32 %v210, %v211
    %v213 = vmax.f32 %v212, 0.0
    %v214 = vsub.f32 %v200, %v205
    %v215 = vadd.f32 %v213, 1e-05
    %v216 = vrsqrt.pop %v215
    %v217 = vmul.f32 %v214, %v216
    %v218 = vlaneseq
    %v219 = vshrl.u32 %v218, 7
    %v220 = vsub.s32 2, %v219
    %v221 = vrot.slane %v59, %v220
    %v222 = vmul.f32 %v217, %v221
    %v223 = vlaneseq
    %v224 = vshrl.u32 %v223, 7
    %v225 = vsub.s32 3, %v224
    %v226 = vrot.slane %v59, %v225
    %v227 = vadd.f32 %v222, %v226
    %v228 = vld [vmem:[#allocation8 + $0x20] sm:$0xf]
    %v229 = vld [vmem:[#allocation8 + $0x24] sm:$0xf]
    %v230 = vld [vmem:[#allocation8 + $0x28] sm:$0xf]
    %v231 = vld [vmem:[#allocation8 + $0x30] sm:$0xf]
    %v232 = vld [vmem:[#allocation8 + $0x34] sm:$0xf]
    %v233 = vld [vmem:[#allocation8 + $0x38] sm:$0xf]
    %v234 = vld [vmem:[#allocation8 + $0x3c] sm:$0xf]
    %v235 = vld [vmem:[#allocation8 + $0x40] sm:$0xf]
    %v236 = vpack.c.bf16 %v227, %v227
    %v237 = vlaneseq
    %v238 = vshrl.u32 %v237, 7
    %v239 = vsub.s32 4, %v238
    %v240 = vrot.slane %v59, %v239
    %v244 = vunpack.c.l.b16 %v228
    %v245 = vunpack.c.l.b16 %v229
    %v246 = vunpack.c.l.b16 %v230
    %v247 = vpack.c.b16 %v245, %v244
    %v248 = vpack.c.b16 %v246, %v246
    %vm250 = vcmask 195584
    %v252 = vsel %vm250, %v236, 0
    %vm254 = vcmask 1043456
    %v256 = vsel %vm254, %v248, 0
    %258 = vmatprep.subr.bf16.mxu0 0
    %259 = vmatpush1.bf16.msra.mxu0 %v247
    %260 = vmatprep.subr.bf16.mxu0 0
    %261 = vmatpush1.bf16.msra.mxu0 %v256
    %262 = vmatprep.subr.bf16.mxu0 0
    %263 = vmatpush1.bf16.msra.mxu0 0
    %264 = vmatprep.subr.bf16.mxu0 0
    %265 = vmatpush1.bf16.msra.mxu0 0
    %266 = vmatprep.subr.bf16.mxu0 0
    %267 = vmatpush1.bf16.msra.mxu0 0
    %268 = vmatprep.subr.bf16.mxu0 0
    %269 = vmatpush1.bf16.msra.mxu0 0
    %270 = vmatprep.subr.bf16.mxu0 0
    %271 = vmatpush1.bf16.msra.mxu0 0
    %272 = vmatprep.subr.bf16.mxu0 0
    %273 = vmatpush1.bf16.msra.mxu0 0
    %274 = vmatprep.subr.bf16.mxu0 0
    %275 = vmatpush1.bf16.msra.mxu0 0
    %276 = vmatprep.subr.bf16.mxu0 0
    %277 = vmatpush1.bf16.msra.mxu0 0
    %278 = vmatprep.subr.bf16.mxu0 0
    %279 = vmatpush1.bf16.msra.mxu0 0
    %280 = vmatprep.subr.bf16.mxu0 0
    %281 = vmatpush1.bf16.msra.mxu0 0
    %282 = vmatprep.subr.bf16.mxu0 0
    %283 = vmatpush1.bf16.msra.mxu0 0
    %284 = vmatprep.subr.bf16.mxu0 0
    %285 = vmatpush1.bf16.msra.mxu0 0
    %286 = vmatprep.subr.bf16.mxu0 0
    %287 = vmatpush1.bf16.msra.mxu0 0
    %288 = vmatprep.subr.bf16.mxu0 0
    %289 = vmatpush1.bf16.msra.mxu0 0
    %290 = vmatprep.mubr.bf16.mxu0 0
    %291 = vmatmul.mubr.bf16.gmra.mrb[0].mxu0 %v252
    %v292 = vpop.f32.mrb[0].mxu0
    %v293 = vadd.f32 %v240, %v292
    %v294 = vpop.f32.mrb[0].mxu0
    %v295 = vpop.f32.mrb[0].mxu0
    %v296 = vpop.f32.mrb[0].mxu0
    %297 = vdwg.mxu0
    %v298 = vmax.f32 %v293, 0.0
    %v299 = vpack.c.bf16 %v298, %v298
    %v300 = vlaneseq
    %v301 = vshrl.u32 %v300, 7
    %v302 = vsub.s32 5, %v301
    %v303 = vrot.slane %v59, %v302
    %v309 = vunpack.c.l.b16 %v231
    %v310 = vunpack.c.l.b16 %v232
    %v311 = vunpack.c.l.b16 %v233
    %v312 = vunpack.c.l.b16 %v234
    %v313 = vunpack.c.l.b16 %v235
    %v314 = vpack.c.b16 %v310, %v309
    %v315 = vpack.c.b16 %v312, %v311
    %v316 = vpack.c.b16 %v313, %v313
    %vm319 = vcmask 318464
    %v321 = vsel %vm319, %v299, 0
    %vm323 = vcmask 1042432
    %v324 = vsel %vm323, 4294967295, 65535
    %v325 = vsel %vm254, %v324, 0
    %v327 = vand.u32 %v316, %v325
    %329 = vmatprep.subr.bf16.mxu0 0
    %330 = vmatpush1.bf16.msra.mxu0 %v314
    %331 = vmatprep.subr.bf16.mxu0 0
    %332 = vmatpush1.bf16.msra.mxu0 %v315
    %333 = vmatprep.subr.bf16.mxu0 0
    %334 = vmatpush1.bf16.msra.mxu0 %v327
    %335 = vmatprep.subr.bf16.mxu0 0
    %336 = vmatpush1.bf16.msra.mxu0 0
    %337 = vmatprep.subr.bf16.mxu0 0
    %338 = vmatpush1.bf16.msra.mxu0 0
    %339 = vmatprep.subr.bf16.mxu0 0
    %340 = vmatpush1.bf16.msra.mxu0 0
    %341 = vmatprep.subr.bf16.mxu0 0
    %342 = vmatpush1.bf16.msra.mxu0 0
    %343 = vmatprep.subr.bf16.mxu0 0
    %344 = vmatpush1.bf16.msra.mxu0 0
    %345 = vmatprep.subr.bf16.mxu0 0
    %346 = vmatpush1.bf16.msra.mxu0 0
    %347 = vmatprep.subr.bf16.mxu0 0
    %348 = vmatpush1.bf16.msra.mxu0 0
    %349 = vmatprep.subr.bf16.mxu0 0
    %350 = vmatpush1.bf16.msra.mxu0 0
    %351 = vmatprep.subr.bf16.mxu0 0
    %352 = vmatpush1.bf16.msra.mxu0 0
    %353 = vmatprep.subr.bf16.mxu0 0
    %354 = vmatpush1.bf16.msra.mxu0 0
    %355 = vmatprep.subr.bf16.mxu0 0
    %356 = vmatpush1.bf16.msra.mxu0 0
    %357 = vmatprep.subr.bf16.mxu0 0
    %358 = vmatpush1.bf16.msra.mxu0 0
    %359 = vmatprep.subr.bf16.mxu0 0
    %360 = vmatpush1.bf16.msra.mxu0 0
    %361 = vmatprep.mubr.bf16.mxu0 0
    %362 = vmatmul.mubr.bf16.gmra.mrb[0].mxu0 %v321
    %v363 = vpop.f32.mrb[0].mxu0
    %v364 = vadd.f32 %v303, %v363
    %v365 = vpop.f32.mrb[0].mxu0
    %v366 = vpop.f32.mrb[0].mxu0
    %v367 = vpop.f32.mrb[0].mxu0
    %368 = vdwg.mxu0
    %370 = vrot.lane.b32.xlu0 %v293, 89
    %v371 = vpop.permute.xlu0 %370
    %v373 = vadd.f32 %v364, %v371
    %vm374 = vcmask 517120
    %v375 = vsel %vm374, %v373, 0.0
    %376 = vadd.xlane.f32.xlu0 %v375
    %v377 = vpop.xlane.xlu0 %376
    %v378 = vmul.f32 %v377, 0.015625
    %v379 = vmul.f32 %v373, %v373
    %v380 = vsel %vm374, %v379, 0.0
    %381 = vadd.xlane.f32.xlu0 %v380
    %v382 = vpop.xlane.xlu0 %381
    %v383 = vmul.f32 %v382, 0.015625
    %v384 = vmul.f32 %v378, %v378
    %v385 = vsub.f32 %v383, %v384
    %v386 = vmax.f32 %v385, 0.0
    %v387 = vsub.f32 %v373, %v378
    %v388 = vadd.f32 %v386, 1e-05
    %v389 = vrsqrt.pop %v388
    %v390 = vmul.f32 %v387, %v389
    %v391 = vlaneseq
    %v392 = vshrl.u32 %v391, 7
    %v393 = vsub.s32 6, %v392
    %v394 = vrot.slane %v59, %v393
    %v395 = vmul.f32 %v390, %v394
    %v396 = vlaneseq
    %v397 = vshrl.u32 %v396, 7
    %v398 = vsub.s32 7, %v397
    %v399 = vrot.slane %v59, %v398
    %v400 = vadd.f32 %v395, %v399
    %v401 = vld [vmem:[#allocation3] sm:$0xff]
    %403 = vrot.lane.b32.xlu0 %v401, 16
    %v404 = vpop.permute.xlu0 %403
    %vm406 = vcmask 195712
    %407 = vst.msk [vmem:[#allocation2] sm:$0xff] %vm406, %v404
    %vm408 = vcmask 122880
    %409 = vst.msk [vmem:[#allocation2] sm:$0x1] %vm408, %v400
    %411 = vrot.lane.b32.xlu0 %v400, 112
    %v412 = vpop.permute.xlu0 %411
    %414 = vst.msk [vmem:[#allocation2 + $0x1] sm:$0x1] %vm408, %v412
    %415 = vrot.lane.b32.xlu0 %v400, 96
    %v416 = vpop.permute.xlu0 %415
    %418 = vst.msk [vmem:[#allocation2 + $0x2] sm:$0x1] %vm408, %v416
    %419 = vrot.lane.b32.xlu0 %v400, 80
    %v420 = vpop.permute.xlu0 %419
    %422 = vst.msk [vmem:[#allocation2 + $0x3] sm:$0x1] %vm408, %v420
    %vm423 = vcmask 123905
    %424 = vst.msk [vmem:[#allocation2 + $0x3] sm:$0x2] %vm423, %v400
    %425 = vst.msk [vmem:[#allocation2 + $0x4] sm:$0x2] %vm423, %v412
    %426 = vst.msk [vmem:[#allocation2 + $0x5] sm:$0x2] %vm423, %v416
    %427 = vst.msk [vmem:[#allocation2 + $0x6] sm:$0x2] %vm423, %v420
    %v428 = vld [vmem:[#allocation2] sm:$0xff]
    %v429 = vld [vmem:[#allocation8 + $0x48] sm:$0xf]
    %v430 = vld [vmem:[#allocation8 + $0x4c] sm:$0xf]
    %v431 = vld [vmem:[#allocation8 + $0x50] sm:$0xf]
    %v432 = vld [vmem:[#allocation8 + $0x58] sm:$0xf]
    %v433 = vld [vmem:[#allocation8 + $0x5c] sm:$0xf]
    %v434 = vld [vmem:[#allocation8 + $0x60] sm:$0x3]
    %v435 = vpack.c.bf16 %v428, %v428
    %v436 = vlaneseq
    %v437 = vshrl.u32 %v436, 7
    %v438 = vsub.s32 0, %v437
    %v439 = vrot.slane %v60, %v438
    %v443 = vunpack.c.l.b16 %v429
    %v444 = vunpack.c.l.b16 %v430
    %v445 = vunpack.c.l.b16 %v431
    %v446 = vpack.c.b16 %v444, %v443
    %v447 = vpack.c.b16 %v445, %v445
    %v450 = vsel %vm250, %v435, 0
    %v453 = vsel %vm254, %v447, 0
    %455 = vmatprep.subr.bf16.mxu0 0
    %456 = vmatpush1.bf16.msra.mxu0 %v446
    %457 = vmatprep.subr.bf16.mxu0 0
    %458 = vmatpush1.bf16.msra.mxu0 %v453
    %459 = vmatprep.subr.bf16.mxu0 0
    %460 = vmatpush1.bf16.msra.mxu0 0
    %461 = vmatprep.subr.bf16.mxu0 0
    %462 = vmatpush1.bf16.msra.mxu0 0
    %463 = vmatprep.subr.bf16.mxu0 0
    %464 = vmatpush1.bf16.msra.mxu0 0
    %465 = vmatprep.subr.bf16.mxu0 0
    %466 = vmatpush1.bf16.msra.mxu0 0
    %467 = vmatprep.subr.bf16.mxu0 0
    %468 = vmatpush1.bf16.msra.mxu0 0
    %469 = vmatprep.subr.bf16.mxu0 0
    %470 = vmatpush1.bf16.msra.mxu0 0
    %471 = vmatprep.subr.bf16.mxu0 0
    %472 = vmatpush1.bf16.msra.mxu0 0
    %473 = vmatprep.subr.bf16.mxu0 0
    %474 = vmatpush1.bf16.msra.mxu0 0
    %475 = vmatprep.subr.bf16.mxu0 0
    %476 = vmatpush1.bf16.msra.mxu0 0
    %477 = vmatprep.subr.bf16.mxu0 0
    %478 = vmatpush1.bf16.msra.mxu0 0
    %479 = vmatprep.subr.bf16.mxu0 0
    %480 = vmatpush1.bf16.msra.mxu0 0
    %481 = vmatprep.subr.bf16.mxu0 0
    %482 = vmatpush1.bf16.msra.mxu0 0
    %483 = vmatprep.subr.bf16.mxu0 0
    %484 = vmatpush1.bf16.msra.mxu0 0
    %485 = vmatprep.subr.bf16.mxu0 0
    %486 = vmatpush1.bf16.msra.mxu0 0
    %487 = vmatprep.mubr.bf16.mxu0 0
    %488 = vmatmul.mubr.bf16.gmra.mrb[0].mxu0 %v450
    %v489 = vpop.f32.mrb[0].mxu0
    %v490 = vadd.f32 %v439, %v489
    %v491 = vpop.f32.mrb[0].mxu0
    %v492 = vpop.f32.mrb[0].mxu0
    %v493 = vpop.f32.mrb[0].mxu0
    %494 = vdwg.mxu0
    %v495 = vmax.f32 %v490, 0.0
    %v496 = vpack.c.bf16 %v495, %v495
    %v497 = vlaneseq
    %v498 = vshrl.u32 %v497, 7
    %v499 = vsub.s32 1, %v498
    %v500 = vrot.slane %v60, %v499
    %v504 = vunpack.c.l.b16 %v432
    %v505 = vunpack.c.l.b16 %v433
    %v506 = vunpack.c.l.b16 %v434
    %v507 = vpack.c.b16 %v505, %v504
    %v508 = vpack.c.b16 %v506, %v506
    %vm510 = vcmask 162816
    %v512 = vsel %vm510, %v496, 0
    %vm514 = vcmask 1041408
    %v516 = vsel %vm514, %v508, 0
    %518 = vmatprep.subr.bf16.mxu0 0
    %519 = vmatpush1.bf16.msra.mxu0 %v507
    %520 = vmatprep.subr.bf16.mxu0 0
    %521 = vmatpush1.bf16.msra.mxu0 %v516
    %522 = vmatprep.subr.bf16.mxu0 0
    %523 = vmatpush1.bf16.msra.mxu0 0
    %524 = vmatprep.subr.bf16.mxu0 0
    %525 = vmatpush1.bf16.msra.mxu0 0
    %526 = vmatprep.subr.bf16.mxu0 0
    %527 = vmatpush1.bf16.msra.mxu0 0
    %528 = vmatprep.subr.bf16.mxu0 0
    %529 = vmatpush1.bf16.msra.mxu0 0
    %530 = vmatprep.subr.bf16.mxu0 0
    %531 = vmatpush1.bf16.msra.mxu0 0
    %532 = vmatprep.subr.bf16.mxu0 0
    %533 = vmatpush1.bf16.msra.mxu0 0
    %534 = vmatprep.subr.bf16.mxu0 0
    %535 = vmatpush1.bf16.msra.mxu0 0
    %536 = vmatprep.subr.bf16.mxu0 0
    %537 = vmatpush1.bf16.msra.mxu0 0
    %538 = vmatprep.subr.bf16.mxu0 0
    %539 = vmatpush1.bf16.msra.mxu0 0
    %540 = vmatprep.subr.bf16.mxu0 0
    %541 = vmatpush1.bf16.msra.mxu0 0
    %542 = vmatprep.subr.bf16.mxu0 0
    %543 = vmatpush1.bf16.msra.mxu0 0
    %544 = vmatprep.subr.bf16.mxu0 0
    %545 = vmatpush1.bf16.msra.mxu0 0
    %546 = vmatprep.subr.bf16.mxu0 0
    %547 = vmatpush1.bf16.msra.mxu0 0
    %548 = vmatprep.subr.bf16.mxu0 0
    %549 = vmatpush1.bf16.msra.mxu0 0
    %550 = vmatprep.mubr.bf16.mxu0 0
    %551 = vmatmul.mubr.bf16.gmra.mrb[0].mxu0 %v512
    %v552 = vpop.f32.mrb[0].mxu0
    %v553 = vadd.f32 %v500, %v552
    %v554 = vpop.f32.mrb[0].mxu0
    %v555 = vpop.f32.mrb[0].mxu0
    %v556 = vpop.f32.mrb[0].mxu0
    %557 = vdwg.mxu0
    %559 = vrot.lane.b32.xlu0 %v490, 108
    %v560 = vpop.permute.xlu0 %559
    %v562 = vadd.f32 %v553, %v560
    %vm563 = vcmask 130048
    %v564 = vsel %vm563, %v562, 0.0
    %565 = vadd.xlane.f32.xlu0 %v564
    %v566 = vpop.xlane.xlu0 %565
    %v567 = vmul.f32 %v566, 0.0625
    %v568 = vmul.f32 %v562, %v562
    %v569 = vsel %vm563, %v568, 0.0
    %570 = vadd.xlane.f32.xlu0 %v569
    %v571 = vpop.xlane.xlu0 %570
    %v572 = vmul.f32 %v571, 0.0625
    %v573 = vmul.f32 %v567, %v567
    %v574 = vsub.f32 %v572, %v573
    %v575 = vmax.f32 %v574, 0.0
    %v576 = vsub.f32 %v562, %v567
    %v577 = vadd.f32 %v575, 1e-05
    %v578 = vrsqrt.pop %v577
    %v579 = vmul.f32 %v576, %v578
    %v580 = vlaneseq
    %v581 = vshrl.u32 %v580, 7
    %v582 = vsub.s32 2, %v581
    %v583 = vrot.slane %v60, %v582
    %v584 = vmul.f32 %v579, %v583
    %v585 = vlaneseq
    %v586 = vshrl.u32 %v585, 7
    %v587 = vsub.s32 3, %v586
    %v588 = vrot.slane %v60, %v587
    %v589 = vadd.f32 %v584, %v588
    %v590 = vld [vmem:[#allocation6] sm:$0xff]
    %v591 = vadd.f32 %v589, %v590
    %592 = vst.msk [vmem:[#allocation9] sm:$0xff] %vm563, %v591
    // Predicated region
    $region34: #{fwd.1} parent=1 // pred_check
      _
    $region35: #{fwd.1} parent=1 // pred_check_branch
      %594 = sbr.rel (0) target = $region37
    $region36: #{fwd.1} parent=1 // pred_region
      %s596 = ssub.s32 128, 128
      %597 = vsyncadd [#allocation5], %s596
      %s599 = sshll.u32 [#allocation9], 4
      %s600 = int_to_ptr.vmem [resolvable:$true] %s599
      %602 = dma.vmem_to_hbm [thread:$0]  %s600, 128, %s5, [#allocation5]
    $region37: #{fwd.1} parent=1 // pred_fallthru
      _
    // Predicated region
    $region38: #{fwd.1} parent=1 // pred_check
      _
    $region39: #{fwd.1} parent=1 // pred_check_branch
      %604 = sbr.rel (0) target = $region41
    $region40: #{fwd.1} parent=1 // pred_region
      %605 = dma.done [#allocation5], 128
    $region41: #{fwd.1} parent=1 // pred_fallthru
      _
    %606 = vsyncpa [#allocation4], 1
    %607 = vsyncpa [#allocation7], 1
    %608 = vsyncpa [#allocation5], 1

</llo_original>
